<compile_context>
chip_gen: v7x
topology: tpu7x:2x2x1
jax: 0.10.0
libtpu: 0.0.40
codegen_flags: <defaults>
</compile_context>

<pallas_src>
import functools

import jax
import jax.numpy as jnp
from jax.experimental import pallas as pl
from jax.experimental.pallas import tpu as pltpu


def _round_up(x, m):
    return ((x + m - 1) // m) * m


def _pad2d(x, rows, cols):
    r, c = x.shape
    if r == rows and c == cols:
        return x
    return jnp.pad(x, ((0, rows - r), (0, cols - c)))


# ----------------------------------------------------------------------------
# Tiled matmul + bias (+ ReLU) kernel: the conv hot path (im2col'd)
#   - bf16 operands for the MXU, f32 accumulator scratch
#   - bounded tiles: tm=256, tn in {256,128}, tk in {512,256,128}
# ----------------------------------------------------------------------------
def _matmul_bias_act_kernel(a_ref, b_ref, bias_ref, o_ref, acc_ref, *, apply_relu):
    k = pl.program_id(2)

    @pl.when(k == 0)
    def _():
        acc_ref[...] = jnp.zeros_like(acc_ref)

    acc_ref[...] += jnp.dot(a_ref[...], b_ref[...], preferred_element_type=jnp.float32)

    @pl.when(k == pl.num_programs(2) - 1)
    def _():
        out = acc_ref[...] + bias_ref[...]
        if apply_relu:
            out = jnp.maximum(out, 0.0)
        o_ref[...] = out.astype(o_ref.dtype)


def matmul_bias_act(a, b, bias, *, apply_relu):
    # a: (M, K), b: (K, N), bias: (N,)
    M, K = a.shape
    K2, N = b.shape
    assert K == K2

    tm = 256
    Mp = _round_up(M, tm)
    Kp = _round_up(K, 128)
    tk = 512 if Kp % 512 == 0 else (256 if Kp % 256 == 0 else 128)
    Np = _round_up(N, 128)
    tn = 256 if Np % 256 == 0 else 128

    # bf16 operands halve HBM/VMEM traffic and run at MXU-native rate; the
    # accumulator / bias / ReLU stay in f32.
    a_p = _pad2d(a.astype(jnp.bfloat16), Mp, Kp)
    b_p = _pad2d(b.astype(jnp.bfloat16), Kp, Np)
    bias_p = bias.reshape(1, N).astype(jnp.float32)
    if Np != N:
        bias_p = jnp.pad(bias_p, ((0, 0), (0, Np - N)))

    grid = (Mp // tm, Np // tn, Kp // tk)

    out = pl.pallas_call(
        functools.partial(_matmul_bias_act_kernel, apply_relu=apply_relu),
        out_shape=jax.ShapeDtypeStruct((Mp, Np), jnp.float32),
        grid_spec=pltpu.PrefetchScalarGridSpec(
            num_scalar_prefetch=0,
            grid=grid,
            in_specs=[
                pl.BlockSpec((tm, tk), lambda i, j, k: (i, k)),
                pl.BlockSpec((tk, tn), lambda i, j, k: (k, j)),
                pl.BlockSpec((1, tn), lambda i, j, k: (0, j)),
            ],
            out_specs=pl.BlockSpec((tm, tn), lambda i, j, k: (i, j)),
            scratch_shapes=[pltpu.VMEM((tm, tn), jnp.float32)],
        ),
        compiler_params=pltpu.CompilerParams(
            dimension_semantics=("parallel", "parallel", "arbitrary"),
            vmem_limit_bytes=48 * 1024 * 1024,
        ),
    )(a_p, b_p, bias_p)
    if Mp != M or Np != N:
        out = out[:M, :N]
    return out


# ----------------------------------------------------------------------------
# MSE reduction kernel: gridded over row blocks, scalar accumulator in VMEM
# ----------------------------------------------------------------------------
def _mse_kernel(a_ref, b_ref, o_ref, acc_ref, *, inv_n):
    i = pl.program_id(0)

    @pl.when(i == 0)
    def _():
        acc_ref[...] = jnp.zeros_like(acc_ref)

    d = a_ref[...] - b_ref[...]
    acc_ref[...] += jnp.sum(d * d, keepdims=True)  # (1, 1)

    @pl.when(i == pl.num_programs(0) - 1)
    def _():
        o_ref[...] = acc_ref[...] * inv_n


def mse_loss(y_pred, gt):
    n = y_pred.size
    a = y_pred.reshape(-1).astype(jnp.float32)
    b = gt.reshape(-1).astype(jnp.float32)
    lanes = 128
    rows = _round_up(n, lanes) // lanes
    tr = 512 if rows >= 512 else _round_up(rows, 8)
    rows_p = _round_up(rows, tr)
    total = rows_p * lanes
    a_p = jnp.zeros((total,), jnp.float32).at[:n].set(a).reshape(rows_p, lanes)
    b_p = jnp.zeros((total,), jnp.float32).at[:n].set(b).reshape(rows_p, lanes)

    out = pl.pallas_call(
        functools.partial(_mse_kernel, inv_n=1.0 / n),
        out_shape=jax.ShapeDtypeStruct((1, 1), jnp.float32),
        grid_spec=pltpu.PrefetchScalarGridSpec(
            num_scalar_prefetch=0,
            grid=(rows_p // tr,),
            in_specs=[
                pl.BlockSpec((tr, lanes), lambda i: (i, 0)),
                pl.BlockSpec((tr, lanes), lambda i: (i, 0)),
            ],
            out_specs=pl.BlockSpec((1, 1), lambda i: (0, 0)),
            scratch_shapes=[pltpu.VMEM((1, 1), jnp.float32)],
        ),
        compiler_params=pltpu.CompilerParams(
            dimension_semantics=("arbitrary",),
        ),
    )(a_p, b_p)
    return out[0, 0]


# ----------------------------------------------------------------------------
# LPIPS per-layer distance kernel (gridded over HW blocks):
#   unit-normalize over channels (EUP reciprocal), squared diff, nonneg 1x1
#   "lin" weights, accumulate spatial sum, divide by HW at the last step.
# ----------------------------------------------------------------------------
def _lpips_layer_kernel(f0_ref, f1_ref, w_ref, o_ref, acc_ref, *, inv_hw):
    j = pl.program_id(0)

    @pl.when(j == 0)
    def _():
        acc_ref[...] = jnp.zeros_like(acc_ref)

    eps = 1e-10
    f0 = f0_ref[...]  # (B, thw, C)
    f1 = f1_ref[...]
    inv0 = pl.reciprocal(
        jnp.sqrt(jnp.sum(f0 * f0, axis=-1, keepdims=True)) + eps, approx=True)
    inv1 = pl.reciprocal(
        jnp.sqrt(jnp.sum(f1 * f1, axis=-1, keepdims=True)) + eps, approx=True)
    d = (f0 * inv0 - f1 * inv1) ** 2
    s = jnp.sum(d * w_ref[...], axis=-1)                # (B, thw)
    acc_ref[...] += jnp.sum(s, axis=-1, keepdims=True)  # (B, 1)

    @pl.when(j == pl.num_programs(0) - 1)
    def _():
        o_ref[...] = acc_ref[...] * inv_hw


def lpips_layer_distance(f0, f1, w):
    # f0, f1: (B, H, W, C) features; w: (C,) nonneg lin weights
    B, H, W, C = f0.shape
    HW = H * W
    thw = 512 if HW >= 512 else _round_up(HW, 8)
    HWp = _round_up(HW, thw)
    f0r = f0.reshape(B, HW, C)
    f1r = f1.reshape(B, HW, C)
    if HWp != HW:
        # zero-padded pixels normalize to zero and contribute nothing
        f0r = jnp.pad(f0r, ((0, 0), (0, HWp - HW), (0, 0)))
        f1r = jnp.pad(f1r, ((0, 0), (0, HWp - HW), (0, 0)))
    wr = w.reshape(1, 1, C)

    out = pl.pallas_call(
        functools.partial(_lpips_layer_kernel, inv_hw=1.0 / HW),
        out_shape=jax.ShapeDtypeStruct((B, 1), jnp.float32),
        grid_spec=pltpu.PrefetchScalarGridSpec(
            num_scalar_prefetch=0,
            grid=(HWp // thw,),
            in_specs=[
                pl.BlockSpec((B, thw, C), lambda j: (0, j, 0)),
                pl.BlockSpec((B, thw, C), lambda j: (0, j, 0)),
                pl.BlockSpec((1, 1, C), lambda j: (0, 0, 0)),
            ],
            out_specs=pl.BlockSpec((B, 1), lambda j: (0, 0)),
            scratch_shapes=[pltpu.VMEM((B, 1), jnp.float32)],
        ),
        compiler_params=pltpu.CompilerParams(
            dimension_semantics=("arbitrary",),
        ),
    )(f0r, f1r, wr)
    return out  # (B, 1)


# ----------------------------------------------------------------------------
# VGG16 feature extractor (LPIPS taps at relu1_2, relu2_2, relu3_3, relu4_3, relu5_3)
# ----------------------------------------------------------------------------
VGG_CFG = [64, 64, "M", 128, 128, "M", 256, 256, 256, "M", 512, 512, 512, "M", 512, 512, 512]
TAP_AFTER_CONV = {1, 3, 6, 9, 12}
LIN_CHANNELS = [64, 128, 256, 512, 512]

# LPIPS ScalingLayer constants (fixed, not learned)
_SHIFT = jnp.array([-0.030, -0.088, -0.188], jnp.float32)
_SCALE = jnp.array([0.458, 0.448, 0.450], jnp.float32)


def maxpool2x2(x):  # (B, H, W, C), H and W even
    B, H, W, C = x.shape
    return x.reshape(B, H // 2, 2, W // 2, 2, C).max(axis=(2, 4))


def conv3x3_relu(x, w, b):
    # x: (B, H, W, Cin); w: (9*Cin, Cout) with K index = (kh*3+kw)*Cin + cin; b: (Cout,)
    # TODO(synk): the im2col below still materializes a 9x activation expansion
    # in HBM; fusing the 9 shifted taps into the matmul grid via manual
    # shifted-window DMA would remove this traffic for the large early layers.
    B, H, W, C = x.shape
    xp = jnp.pad(x, ((0, 0), (1, 1), (1, 1), (0, 0)))
    patches = [xp[:, i:i + H, j:j + W, :] for i in range(3) for j in range(3)]
    a = jnp.concatenate(patches, axis=-1).reshape(B * H * W, 9 * C)
    out = matmul_bias_act(a, w, b, apply_relu=True)
    return out.reshape(B, H, W, w.shape[1])


def vgg_features(x, convs):
    feats = []
    conv_idx = 0
    h = x
    for v in VGG_CFG:
        if v == "M":
            h = maxpool2x2(h)
        else:
            w, b = convs[conv_idx]
            h = conv3x3_relu(h, w, b)
            if conv_idx in TAP_AFTER_CONV:
                feats.append(h)
            conv_idx += 1
    return feats


def init_params(key):
    # TODO(synk): real LPIPS uses pretrained VGG16 + trained lin weights; we
    # initialize deterministic synthetic weights of the same shapes instead.
    params = {"convs": [], "lins": []}
    keys = jax.random.split(key, 32)
    ki = 0
    cin = 3
    for v in VGG_CFG:
        if v == "M":
            continue
        fan_in = 9 * cin
        w = jax.random.normal(keys[ki], (fan_in, v), jnp.float32) * jnp.sqrt(2.0 / fan_in)
        b = jnp.zeros((v,), jnp.float32)
        params["convs"].append((w, b))
        cin = v
        ki += 1
    for c in LIN_CHANNELS:
        # LPIPS lin weights are nonnegative 1x1 convs, no bias (dropout = identity in eval)
        params["lins"].append(jax.random.uniform(keys[ki], (c,), jnp.float32, 0.0, 0.1))
        ki += 1
    return params


# ----------------------------------------------------------------------------
# Full loss: MSE(y_pred, gt) + reg * LPIPS_vgg(y_pred, gt).mean()
# ----------------------------------------------------------------------------
def l2_lpips_reg_loss(y_pred, gt, params, reg):
    # y_pred, gt: (B, 3, H, W), NCHW like the PyTorch module, values ~[-1, 1]
    l2 = mse_loss(y_pred, gt)

    B = y_pred.shape[0]
    # NCHW -> NHWC, run VGG ONCE on the concatenated [y_pred; gt] batch so
    # weight DMAs / launches are shared and M per matmul doubles.
    yp = jnp.transpose(y_pred, (0, 2, 3, 1)).astype(jnp.float32)
    g = jnp.transpose(gt, (0, 2, 3, 1)).astype(jnp.float32)
    x = jnp.concatenate([yp, g], axis=0)
    x = (x - _SHIFT) / _SCALE  # LPIPS scaling layer (tiny elementwise glue)

    feats = vgg_features(x, params["convs"])

    per_layer = [
        lpips_layer_distance(f[:B], f[B:], w)
        for f, w in zip(feats, params["lins"])
    ]
    lpips_val = sum(per_layer)          # (B, 1): sum over the 5 feature layers
    lpips_mean = jnp.mean(lpips_val)    # .mean() in the torch module

    return l2 + reg * lpips_mean


if __name__ == "__main__":
    key = jax.random.PRNGKey(0)
    k1, k2, kp = jax.random.split(key, 3)
    B, C, H, W = 2, 3, 16, 16
    y_pred = jax.random.uniform(k1, (B, C, H, W), jnp.float32, -1.0, 1.0)
    gt = jax.random.uniform(k2, (B, C, H, W), jnp.float32, -1.0, 1.0)
    params = init_params(kp)
    reg = 0.5

    loss = l2_lpips_reg_loss(y_pred, gt, params, reg)
    jax.block_until_ready(loss)
    print("KERNEL_OK")
</pallas_src>

<mosaic_0001>
module attributes {stable_mosaic.version = 11 : i64} {
  func.func @_mse_kernel(%arg0: i32, %arg1: memref<16x128xf32, #tpu.memory_space<vmem>>, %arg2: memref<16x128xf32, #tpu.memory_space<vmem>>, %arg3: memref<1x1xf32, #tpu.memory_space<vmem>>, %arg4: memref<1x1xf32, #tpu.memory_space<vmem>>) attributes {dimension_semantics = [#tpu.dimension_semantics<arbitrary>], iteration_bounds = array<i64: 1>, scalar_prefetch = 0 : i64, scratch_operands = 1 : i64, tpu.core_type = #tpu.core_type<tc>, window_params = [{transform_indices = @transform_0, window_bounds = array<i64: 16, 128>}, {transform_indices = @transform_1, window_bounds = array<i64: 16, 128>}, {pipeline_mode = #tpu.pipeline_mode<synchronous>, transform_indices = @transform_2, window_bounds = array<i64: 1, 1>}]} {
    %c0_i32 = arith.constant 0 : i32
    %0 = arith.cmpi eq, %arg0, %c0_i32 : i32
    %1 = arith.extui %0 : i1 to i32
    %c0_i32_0 = arith.constant 0 : i32
    %2 = arith.cmpi ne, %1, %c0_i32_0 : i32
    scf.if %2 {
      %cst_10 = arith.constant 0.000000e+00 : f32
      %18 = vector.broadcast %cst_10 : f32 to vector<1x1xf32>
      %c0_11 = arith.constant 0 : index
      %c0_12 = arith.constant 0 : index
      %19 = vector.load %arg4[%c0_11, %c0_12] : memref<1x1xf32, #tpu.memory_space<vmem>>, vector<1x1xf32>
      tpu.vector_store %arg4[%c0_11, %c0_12], %18 {strides = array<i32>} : memref<1x1xf32, #tpu.memory_space<vmem>>, vector<1x1xf32>,
    } else {
    }
    %c0 = arith.constant 0 : index
    %c0_1 = arith.constant 0 : index
    %3 = vector.load %arg1[%c0, %c0_1] : memref<16x128xf32, #tpu.memory_space<vmem>>, vector<16x128xf32>
    %c0_2 = arith.constant 0 : index
    %c0_3 = arith.constant 0 : index
    %4 = vector.load %arg2[%c0_2, %c0_3] : memref<16x128xf32, #tpu.memory_space<vmem>>, vector<16x128xf32>
    %5 = arith.subf %3, %4 : vector<16x128xf32>
    %c0_4 = arith.constant 0 : index
    %c0_5 = arith.constant 0 : index
    %6 = vector.load %arg4[%c0_4, %c0_5] : memref<1x1xf32, #tpu.memory_space<vmem>>, vector<1x1xf32>
    %7 = arith.mulf %5, %5 : vector<16x128xf32>
    %8 = vector.shape_cast %7 : vector<16x128xf32> to vector<1x16x128xf32>
    %cst = arith.constant dense<0.000000e+00> : vector<1xf32>
    %9 = vector.multi_reduction <add>, %8, %cst [1, 2] : vector<1x16x128xf32> to vector<1xf32>
    %10 = vector.shape_cast %9 : vector<1xf32> to vector<1x1x1xf32>
    %11 = vector.extract %10[0, 0, 0] : f32 from vector<1x1x1xf32>
    %12 = vector.broadcast %11 : f32 to vector<1x1xf32>
    %13 = arith.addf %6, %12 : vector<1x1xf32>
    %c0_6 = arith.constant 0 : index
    %c0_7 = arith.constant 0 : index
    %14 = vector.load %arg4[%c0_6, %c0_7] : memref<1x1xf32, #tpu.memory_space<vmem>>, vector<1x1xf32>
    tpu.vector_store %arg4[%c0_6, %c0_7], %13 {strides = array<i32>} : memref<1x1xf32, #tpu.memory_space<vmem>>, vector<1x1xf32>,
    %c0_i32_8 = arith.constant 0 : i32
    %15 = arith.cmpi eq, %arg0, %c0_i32_8 : i32
    %16 = arith.extui %15 : i1 to i32
    %c0_i32_9 = arith.constant 0 : i32
    %17 = arith.cmpi ne, %16, %c0_i32_9 : i32
    scf.if %17 {
      %c0_10 = arith.constant 0 : index
      %c0_11 = arith.constant 0 : index
      %18 = vector.load %arg4[%c0_10, %c0_11] : memref<1x1xf32, #tpu.memory_space<vmem>>, vector<1x1xf32>
      %cst_12 = arith.constant 6.51041686E-4 : f32
      %19 = vector.broadcast %cst_12 : f32 to vector<1x1xf32>
      %20 = arith.mulf %18, %19 : vector<1x1xf32>
      %c0_13 = arith.constant 0 : index
      %c0_14 = arith.constant 0 : index
      %21 = vector.load %arg3[%c0_13, %c0_14] : memref<1x1xf32, #tpu.memory_space<vmem>>, vector<1x1xf32>
      tpu.vector_store %arg3[%c0_13, %c0_14], %20 {strides = array<i32>} : memref<1x1xf32, #tpu.memory_space<vmem>>, vector<1x1xf32>,
    } else {
    }
    return
  }
  func.func @transform_0(%arg0: i32) -> (i32, i32) {
    %c0_i32 = arith.constant 0 : i32
    %c0_i32_0 = arith.constant 0 : i32
    return %arg0, %c0_i32 : i32, i32
  }
  func.func @transform_1(%arg0: i32) -> (i32, i32) {
    %c0_i32 = arith.constant 0 : i32
    %c0_i32_0 = arith.constant 0 : i32
    return %arg0, %c0_i32 : i32, i32
  }
  func.func @transform_2(%arg0: i32) -> (i32, i32) {
    %c0_i32 = arith.constant 0 : i32
    %c0_i32_0 = arith.constant 0 : i32
    %c0_i32_1 = arith.constant 0 : i32
    return %c0_i32, %c0_i32_0 : i32, i32
  }
}

</mosaic_0001>

<llo_original>
// kernel: tpu_custom_call.1
$region0: #{tpu_custom_call.1}
  #allocation0 [shape = 'u32[]', space=smem, size = 0x4, offset = 0x4, fixed_abs, tag = 'smem constant byte address 0x4 - core index']
  #allocation1 [shape = 'u32[144,128]{1,0:T(1,128)}', space=vmem, size = 0x12000, scoped, tag = 'internal scratch']
  #allocation2 [shape = 'f32[1,1]{1,0:T(1,128)}', space=vmem, size = 0x200, scoped, tag = 'scratch operand']
  %s0 = inlined_call_operand.hbm [shape: f32[16,128], index: 0, kind: input, shape index: {}]
  %s1 = inlined_call_operand.hbm [shape: f32[16,128], index: 1, kind: input, shape index: {}]
  %s2 = inlined_call_operand.hbm [shape: f32[1,1], index: 2, kind: output, shape index: {}]
  %s3 = sld [smem:[#allocation0]]
  $region34: #{tpu_custom_call.1} parent=0
    _
  %s5 = ssub.s32 1, %s3
  %s6 = scalar_select 0, %s5, %s3
  $region1: #{tpu_custom_call.1} parent=0
    #allocation3 [shape = 'u8[8192]{0}', space=vmem, size = 0x2000, scoped, tag = 'input window, operand 0, single buffered']
    #allocation4 [shape = 's32[1]{0}', space=sflag, size = 0x4, scoped, tag = 'scoped memory for tpu_custom_call.1']
    #allocation5 [shape = 's32[1]{0}', space=sflag, size = 0x4, scoped, tag = 'scoped memory for tpu_custom_call.1']
    #allocation6 [shape = 'u8[8192]{0}', space=vmem, size = 0x2000, scoped, tag = 'input window, operand 1, single buffered']
    #allocation7 [shape = 's32[1]{0}', space=sflag, size = 0x4, scoped, tag = 'scoped memory for tpu_custom_call.1']
    #allocation8 [shape = 'u8[512]{0}', space=vmem, size = 0x400, scoped, tag = 'output window, operand 0, single buffered']
    %7 = vsyncpa [#allocation4], 0
    %8 = vsyncpa [#allocation7], 0
    %9 = vsyncpa [#allocation5], 0
    // Predicated region
    $region2: #{tpu_custom_call.1} parent=1 // pred_check
      _
    $region3: #{tpu_custom_call.1} parent=1 // pred_check_branch
      %11 = sbr.rel (0) target = $region5
    $region4: #{tpu_custom_call.1} parent=1 // pred_region
      %s13 = ssub.s32 256, 256
      %14 = vsyncadd [#allocation4], %s13
      %s15 = sshll.u32 [#allocation3], 4
      %s16 = int_to_ptr.vmem [resolvable:$true] %s15
      %21 = dma.hbm_to_vmem [thread:$0]  %s0, 256, %s16, [#allocation4], 128, 128, 8
    $region5: #{tpu_custom_call.1} parent=1 // pred_fallthru
      _
    // Predicated region
    $region6: #{tpu_custom_call.1} parent=1 // pred_check
      _
    $region7: #{tpu_custom_call.1} parent=1 // pred_check_branch
      %23 = sbr.rel (0) target = $region9
    $region8: #{tpu_custom_call.1} parent=1 // pred_region
      %s25 = ssub.s32 256, 256
      %26 = vsyncadd [#allocation7], %s25
      %s27 = sshll.u32 [#allocation6], 4
      %s28 = int_to_ptr.vmem [resolvable:$true] %s27
      %33 = dma.hbm_to_vmem [thread:$0]  %s1, 256, %s28, [#allocation7], 128, 128, 8
    $region9: #{tpu_custom_call.1} parent=1 // pred_fallthru
      _
    // Predicated region
    $region10: #{tpu_custom_call.1} parent=1 // pred_check
      _
    $region11: #{tpu_custom_call.1} parent=1 // pred_check_branch
      %35 = sbr.rel (0) target = $region13
    $region12: #{tpu_custom_call.1} parent=1 // pred_region
      %36 = dma.done [#allocation4], 256
    $region13: #{tpu_custom_call.1} parent=1 // pred_fallthru
      _
    // Predicated region
    $region14: #{tpu_custom_call.1} parent=1 // pred_check
      _
    $region15: #{tpu_custom_call.1} parent=1 // pred_check_branch
      %38 = sbr.rel (0) target = $region17
    $region16: #{tpu_custom_call.1} parent=1 // pred_region
      %39 = dma.done [#allocation7], 256
    $region17: #{tpu_custom_call.1} parent=1 // pred_fallthru
      _
    %p40 = scmp.eq.s32.totalorder 0, 0
    // Predicated region
    $region18: #{tpu_custom_call.1} parent=1 // pred_check
      %p41 = pneg %p40
    $region19: #{tpu_custom_call.1} parent=1 // pred_check_branch
      %43 = sbr.rel (%p41) target = $region21
    $region20: #{tpu_custom_call.1} parent=1 // pred_region
      %vm44 = vcmask 0
      %45 = vst.msk [vmem:[#allocation2] sm:$0x1] %vm44, 0.0
    $region21: #{tpu_custom_call.1} parent=1 // pred_fallthru
      _
    %v46 = vld [vmem:[#allocation3] sm:$0xff]
    %v47 = vld [vmem:[#allocation3 + $0x8] sm:$0xff]
    %v48 = vld [vmem:[#allocation6] sm:$0xff]
    %v49 = vld [vmem:[#allocation6 + $0x8] sm:$0xff]
    %v50 = vsub.f32 %v46, %v48
    %v51 = vsub.f32 %v47, %v49
    %v52 = vld [vmem:[#allocation2] sm:$0x1]
    %v53 = vmul.f32 %v50, %v50
    %v54 = vmul.f32 %v51, %v51
    %v55 = vadd.f32 %v53, %v54
    %56 = vadd.xlane.f32.xlu0 %v55
    %v57 = vpop.xlane.xlu0 %56
    %v58 = vrot.slane %v57, 4
    %v59 = vadd.f32 %v57, %v58
    %v60 = vrot.slane %v59, 2
    %v61 = vadd.f32 %v59, %v60
    %v62 = vrot.slane %v61, 1
    %v63 = vadd.f32 %v61, %v62
    %s64 = vtos %v63
    %v65 = vstv %s64
    %v66 = vadd.f32 %v52, %v65
    %vm67 = vcmask 0
    %68 = vst.msk [vmem:[#allocation2] sm:$0x1] %vm67, %v66
    // Predicated region
    $region22: #{tpu_custom_call.1} parent=1 // pred_check
      %p69 = pneg %p40
    $region23: #{tpu_custom_call.1} parent=1 // pred_check_branch
      %71 = sbr.rel (%p69) target = $region25
    $region24: #{tpu_custom_call.1} parent=1 // pred_region
      %v72 = vld [vmem:[#allocation2] sm:$0x1]
      %v73 = vmul.f32 %v72, 0.0006510417
      %74 = vst.msk [vmem:[#allocation8] sm:$0x1] %vm67, %v73
    $region25: #{tpu_custom_call.1} parent=1 // pred_fallthru
      _
    // Predicated region
    $region26: #{tpu_custom_call.1} parent=1 // pred_check
      _
    $region27: #{tpu_custom_call.1} parent=1 // pred_check_branch
      %76 = sbr.rel (0) target = $region29
    $region28: #{tpu_custom_call.1} parent=1 // pred_region
      %s78 = ssub.s32 16, 16
      %79 = vsyncadd [#allocation5], %s78
      %s81 = sshll.u32 [#allocation8], 4
      %s82 = int_to_ptr.vmem [resolvable:$true] %s81
      %84 = dma.vmem_to_hbm [thread:$0]  %s82, 16, %s2, [#allocation5]
    $region29: #{tpu_custom_call.1} parent=1 // pred_fallthru
      _
    // Predicated region
    $region30: #{tpu_custom_call.1} parent=1 // pred_check
      _
    $region31: #{tpu_custom_call.1} parent=1 // pred_check_branch
      %86 = sbr.rel (0) target = $region33
    $region32: #{tpu_custom_call.1} parent=1 // pred_region
      %87 = dma.done [#allocation5], 16
    $region33: #{tpu_custom_call.1} parent=1 // pred_fallthru
      _
    %88 = vsyncpa [#allocation4], 1
    %89 = vsyncpa [#allocation7], 1
    %90 = vsyncpa [#allocation5], 1

</llo_original>
